<compile_context>
chip_gen: v7x
topology: tpu7x:2x2x1
jax: 0.10.0
libtpu: 0.0.40
codegen_flags: <defaults>
</compile_context>

<pallas_src>
import functools

import numpy as np
import jax
import jax.numpy as jnp
from jax import lax
from jax.experimental import pallas as pl
from jax.experimental.pallas import tpu as pltpu

BN_EPS = 1e-5


# ----------------------------------------------------------------------------
# Fused Pallas kernel (one batch element per grid step)
# ----------------------------------------------------------------------------
def _shift_lanes(x, k):
    """y[..., p] = x[..., p + k], zero-filled outside [0, P)."""
    if k == 0:
        return x
    pad = jnp.zeros(x.shape[:-1] + (abs(k),), x.dtype)
    if k > 0:
        return jnp.concatenate([x[..., k:], pad], axis=-1)
    return jnp.concatenate([pad, x[..., :k]], axis=-1)


def highres_up_fused_kernel(x1_ref, x2_ref, up_ref, w1_ref, b1_ref, w2_ref, b2_ref,
                            o_ref, *, W2):
    """Fused HighResUp forward, channel-major layout (C rows, P = H2*W2 lanes).

    x1_ref: (1, C1, H1*W1)    f32   low-res input  (NCHW flattened, channel-major)
    x2_ref: (1, C2, P)        f32   skip connection
    up_ref: (H1*W1, P)        bf16  transposed bilinear-x2 (+ F.pad) matrix
    w1_ref: (3, Cmid, 3*Cin)  bf16  conv1 weights, [kh][co, kw*Cin + ci], BN scale folded
    b1_ref: (Cmid, 1)         f32   conv1 folded BN shift
    w2_ref: (3, Cout, 3*Cmid) bf16  conv2 weights (BN scale folded)
    b2_ref: (Cout, 1)         f32   conv2 folded BN shift
    o_ref:  (1, Cout, P)      f32   output; == NCHW after a free wrapper reshape
    """
    P = x2_ref.shape[-1]

    # ---- 1) bilinear x2 upsample + F.pad: one bf16 MXU matmul, channel-major ---------
    x1u = jnp.dot(x1_ref[0].astype(jnp.bfloat16), up_ref[...],
                  preferred_element_type=jnp.float32)                    # (C1, P) f32

    # ---- 2) channel concat: torch.cat([x2, x1], dim=1); bf16 before the im2col chain -
    x_cat = jnp.concatenate([x2_ref[0].astype(jnp.bfloat16),
                             x1u.astype(jnp.bfloat16)], axis=0)          # (Cin, P) bf16

    # Column (W-boundary) masks shared by both convs (P is the flat pixel index).
    w_pos = lax.broadcasted_iota(jnp.int32, (1, P), 1) % W2
    not_first_col = w_pos > 0
    not_last_col = w_pos < (W2 - 1)

    def conv3x3_bn_relu(x, w_ref_, b_ref_):
        # x: (C, P) bf16 channel-major -> (Co, P) f32.  3x3 conv, padding=1.
        # W-neighbour taps: lane shifts, zeroed at the W boundary.
        xl = jnp.where(not_first_col, _shift_lanes(x, -1), jnp.zeros_like(x))  # x[h, w-1]
        xr = jnp.where(not_last_col, _shift_lanes(x, +1), jnp.zeros_like(x))   # x[h, w+1]
        inner = jnp.concatenate([xl, x, xr], axis=0)           # (3C, P), kw = 0, 1, 2
        # One matmul per kernel row kh (K = 3C), accumulated in f32.  The +/-W2 flat
        # lane shift's zero-fill is exactly the H-boundary zero padding.
        acc = jnp.zeros((w_ref_.shape[1], P), jnp.float32)
        for kh, dp in ((0, -W2), (1, 0), (2, W2)):
            rhs = inner if dp == 0 else _shift_lanes(inner, dp)
            acc = acc + jnp.dot(w_ref_[kh], rhs, preferred_element_type=jnp.float32)
        # BN (scale folded into the weights) shift + ReLU, in f32.
        return jnp.maximum(acc + b_ref_[...], 0.0)

    # ---- 3/4) double conv; conv1 activation never leaves VMEM ------------------------
    y1 = conv3x3_bn_relu(x_cat, w1_ref, b1_ref)                     # (Cmid, P) f32
    y2 = conv3x3_bn_relu(y1.astype(jnp.bfloat16), w2_ref, b2_ref)   # (Cout, P) f32

    # ---- 5) lane-dense store: (Cout, P) channel-major == NCHW (free reshape) ---------
    o_ref[0] = y2.astype(o_ref.dtype)


# ----------------------------------------------------------------------------
# Parameter / layout prep (plain numpy / JAX, trace-time constants)
# ----------------------------------------------------------------------------
def bilinear_matrix(out_size, in_size):
    """1-D bilinear resize matrix, align_corners=True (PyTorch nn.Upsample)."""
    A = np.zeros((out_size, in_size), np.float32)
    if in_size == 1 or out_size == 1:
        A[:, 0] = 1.0
        return A
    scale = (in_size - 1) / (out_size - 1)
    for i in range(out_size):
        src = i * scale
        i0 = min(int(np.floor(src)), in_size - 1)
        i1 = min(i0 + 1, in_size - 1)
        f = src - i0
        A[i, i0] += 1.0 - f
        A[i, i1] += f
    return A


def upsample_pad_matrix_T(H1, W1, H2, W2):
    """U^T of shape (H1*W1, H2*W2) so that x_cm @ U^T == F.pad(upsample_x2(x)) flat.

    Folds the align_corners=True x2 bilinear upsample and PyTorch's F.pad (positive pad
    OR negative crop) into one constant matrix, consumed in bf16 by the kernel.
    """
    Ho, Wo = 2 * H1, 2 * W1
    Ah, Aw = bilinear_matrix(Ho, H1), bilinear_matrix(Wo, W1)
    pt, plft = (H2 - Ho) // 2, (W2 - Wo) // 2         # F.pad top / left (may be < 0)
    Ah_p = np.zeros((H2, H1), np.float32)
    for h2 in range(H2):
        if 0 <= h2 - pt < Ho:
            Ah_p[h2] = Ah[h2 - pt]
    Aw_p = np.zeros((W2, W1), np.float32)
    for w2 in range(W2):
        if 0 <= w2 - plft < Wo:
            Aw_p[w2] = Aw[w2 - plft]
    return np.kron(Ah_p, Aw_p).T                      # (H1*W1, H2*W2)


def fold_bn(gamma, beta, mean, var):
    scale = gamma / jnp.sqrt(var + BN_EPS)
    shift = beta - mean * scale
    return scale.astype(jnp.float32), shift.reshape(-1, 1).astype(jnp.float32)


def conv_weight_kh(w_oihw, bn_scale):
    """(Cout, Cin, 3, 3) torch weight, BN scale folded -> (3, Cout, 3*Cin) bf16.

    Column index of w[kh] is kw*Cin + ci, matching the kernel's [xl | x | xr] row order.
    """
    Cout, Cin = w_oihw.shape[0], w_oihw.shape[1]
    w = w_oihw * bn_scale[:, None, None, None]        # exact f32 scale folding
    w = jnp.transpose(w, (2, 0, 3, 1))                # (kh, co, kw, ci)
    return w.reshape(3, Cout, 3 * Cin).astype(jnp.bfloat16)


# ----------------------------------------------------------------------------
# HighResUp forward (bilinear=True branch) — one fused pallas_call
# ----------------------------------------------------------------------------
def high_res_up_forward(x1, x2, params):
    """x1, x2 in NCHW; returns NCHW, matching the PyTorch module semantics."""
    N, C1, H1, W1 = x1.shape
    _, C2, H2, W2 = x2.shape
    Cmid, Cin = params["w1"].shape[0], params["w1"].shape[1]
    Cout = params["w2"].shape[0]
    assert Cin == C1 + C2
    P = H2 * W2

    # Channel-major (C, H*W) is NCHW flattened: free reshapes, no XLA transposes/casts.
    x1cm = x1.reshape(N, C1, H1 * W1)
    x2cm = x2.reshape(N, C2, P)

    # bf16 MXU operands; BN scale folded into conv weights, only the shift remains.
    upT = jnp.asarray(upsample_pad_matrix_T(H1, W1, H2, W2), dtype=jnp.bfloat16)
    s1, b1 = fold_bn(params["g1"], params["b1"], params["m1"], params["v1"])
    s2, b2 = fold_bn(params["g2"], params["b2"], params["m2"], params["v2"])
    w1 = conv_weight_kh(params["w1"], s1)             # (3, Cmid, 3*Cin)  bf16
    w2 = conv_weight_kh(params["w2"], s2)             # (3, Cout, 3*Cmid) bf16

    flops = 2 * N * P * (H1 * W1 * C1 + 9 * Cin * Cmid + 9 * Cmid * Cout)
    bytes_accessed = (4 * (x1cm.size + x2cm.size + N * Cout * P + b1.size + b2.size)
                      + 2 * (upT.size + w1.size + w2.size))

    out = pl.pallas_call(
        functools.partial(highres_up_fused_kernel, W2=W2),
        out_shape=jax.ShapeDtypeStruct((N, Cout, P), jnp.float32),
        grid=(N,),
        in_specs=[
            pl.BlockSpec((1, C1, H1 * W1), lambda n: (n, 0, 0)),    # x1 channel-major
            pl.BlockSpec((1, C2, P), lambda n: (n, 0, 0)),          # x2 channel-major
            pl.BlockSpec((H1 * W1, P), lambda n: (0, 0)),           # upsample matrix^T
            pl.BlockSpec((3, Cmid, 3 * Cin), lambda n: (0, 0, 0)),  # conv1 weights
            pl.BlockSpec((Cmid, 1), lambda n: (0, 0)),              # conv1 BN shift
            pl.BlockSpec((3, Cout, 3 * Cmid), lambda n: (0, 0, 0)), # conv2 weights
            pl.BlockSpec((Cout, 1), lambda n: (0, 0)),              # conv2 BN shift
        ],
        out_specs=pl.BlockSpec((1, Cout, P), lambda n: (n, 0, 0)),
        compiler_params=pltpu.CompilerParams(dimension_semantics=("parallel",)),
        cost_estimate=pl.CostEstimate(flops=flops, transcendentals=0,
                                      bytes_accessed=bytes_accessed),
    )(x1cm, x2cm, upT, w1, b1, w2, b2)

    # (N, Cout, H2*W2) -> NCHW is a free reshape (no data movement).
    return out.reshape(N, Cout, H2, W2)


# ----------------------------------------------------------------------------
# Pure-JAX reference (XLA conv); conv operands bf16 to mirror MXU precision
# ----------------------------------------------------------------------------
def ref_forward(x1, x2, params):
    _, _, H1, W1 = x1.shape
    _, _, H2, W2 = x2.shape
    Ah = jnp.asarray(bilinear_matrix(2 * H1, H1))
    Aw = jnp.asarray(bilinear_matrix(2 * W1, W1))
    x1u = jnp.einsum("oh,nchw->ncow", Ah, x1.astype(jnp.float32))
    x1u = jnp.einsum("pw,nchw->nchp", Aw, x1u)
    diffY = H2 - x1u.shape[2]
    diffX = W2 - x1u.shape[3]
    x1u = jnp.pad(x1u, ((0, 0), (0, 0),
                        (diffY // 2, diffY - diffY // 2),
                        (diffX // 2, diffX - diffX // 2)))
    x = jnp.concatenate([x2.astype(jnp.float32), x1u], axis=1)

    def cbr(x, w, g, b, m, v):
        y = lax.conv_general_dilated(x.astype(jnp.bfloat16), w.astype(jnp.bfloat16),
                                     (1, 1), "SAME",
                                     dimension_numbers=("NCHW", "OIHW", "NCHW"),
                                     preferred_element_type=jnp.float32)
        s = g / jnp.sqrt(v + BN_EPS)
        return jnp.maximum(y * s[None, :, None, None]
                           + (b - m * s)[None, :, None, None], 0.0)

    y = cbr(x, params["w1"], params["g1"], params["b1"], params["m1"], params["v1"])
    y = cbr(y, params["w2"], params["g2"], params["b2"], params["m2"], params["v2"])
    return y


# ----------------------------------------------------------------------------
if __name__ == "__main__":
    # HighResUp(in_channels=8, out_channels=4, bilinear=True)
    # x1: deeper feature map (N, 4, 8, 8); x2: skip connection (N, 4, 16, 16)
    in_channels, out_channels = 8, 4
    mid_channels = in_channels // 2
    N, H1, W1 = 2, 8, 8
    C1 = in_channels // 2
    C2 = in_channels - C1

    keys = jax.random.split(jax.random.PRNGKey(0), 12)
    x1 = jax.random.normal(keys[0], (N, C1, H1, W1), jnp.float32)
    x2 = jax.random.normal(keys[1], (N, C2, 2 * H1, 2 * W1), jnp.float32)

    params = {
        # conv1: in_channels -> mid_channels (torch layout OIHW, no bias)
        "w1": jax.random.normal(keys[2], (mid_channels, in_channels, 3, 3), jnp.float32) * 0.1,
        "g1": jax.random.uniform(keys[3], (mid_channels,), jnp.float32, 0.5, 1.5),
        "b1": jax.random.normal(keys[4], (mid_channels,), jnp.float32) * 0.1,
        "m1": jax.random.normal(keys[5], (mid_channels,), jnp.float32) * 0.1,
        "v1": jax.random.uniform(keys[6], (mid_channels,), jnp.float32, 0.5, 1.5),
        # conv2: mid_channels -> out_channels
        "w2": jax.random.normal(keys[7], (out_channels, mid_channels, 3, 3), jnp.float32) * 0.1,
        "g2": jax.random.uniform(keys[8], (out_channels,), jnp.float32, 0.5, 1.5),
        "b2": jax.random.normal(keys[9], (out_channels,), jnp.float32) * 0.1,
        "m2": jax.random.normal(keys[10], (out_channels,), jnp.float32) * 0.1,
        "v2": jax.random.uniform(keys[11], (out_channels,), jnp.float32, 0.5, 1.5),
    }

    out = jax.jit(high_res_up_forward)(x1, x2, params)
    out = jax.block_until_ready(out)
    assert out.shape == (N, out_channels, 2 * H1, 2 * W1), out.shape

    ref = ref_forward(x1, x2, params)
    # Tolerance budgets bf16 rounding of MXU operands (upsample matrix, activations and
    # BN-scale-folded weights); accumulation is f32, typical error is ~1e-3.
    max_err = float(jnp.max(jnp.abs(out - ref)))
    assert max_err < 4e-2, f"mismatch vs reference: {max_err}"

    print("KERNEL_OK")
</pallas_src>

<mosaic_0001>
module attributes {stable_mosaic.version = 11 : i64} {
  func.func @highres_up_fused_kernel(%arg0: i32, %arg1: memref<1x4x64xf32, #tpu.memory_space<vmem>>, %arg2: memref<1x4x256xf32, #tpu.memory_space<vmem>>, %arg3: memref<64x256xbf16, #tpu.memory_space<vmem>>, %arg4: memref<3x4x24xbf16, #tpu.memory_space<vmem>>, %arg5: memref<4x1xf32, #tpu.memory_space<vmem>>, %arg6: memref<3x4x12xbf16, #tpu.memory_space<vmem>>, %arg7: memref<4x1xf32, #tpu.memory_space<vmem>>, %arg8: memref<1x4x256xf32, #tpu.memory_space<vmem>>) attributes {dimension_semantics = [#tpu.dimension_semantics<parallel>], iteration_bounds = array<i64: 2>, scalar_prefetch = 0 : i64, scratch_operands = 0 : i64, tpu.core_type = #tpu.core_type<tc>, window_params = [{transform_indices = @transform_0, window_bounds = array<i64: 1, 4, 64>}, {transform_indices = @transform_1, window_bounds = array<i64: 1, 4, 256>}, {pipeline_mode = #tpu.pipeline_mode<synchronous>, transform_indices = @transform_2, window_bounds = array<i64: 64, 256>}, {pipeline_mode = #tpu.pipeline_mode<synchronous>, transform_indices = @transform_3, window_bounds = array<i64: 3, 4, 24>}, {pipeline_mode = #tpu.pipeline_mode<synchronous>, transform_indices = @transform_4, window_bounds = array<i64: 4, 1>}, {pipeline_mode = #tpu.pipeline_mode<synchronous>, transform_indices = @transform_5, window_bounds = array<i64: 3, 4, 12>}, {pipeline_mode = #tpu.pipeline_mode<synchronous>, transform_indices = @transform_6, window_bounds = array<i64: 4, 1>}, {transform_indices = @transform_7, window_bounds = array<i64: 1, 4, 256>}]} {
    %c0 = arith.constant 0 : index
    %c0_0 = arith.constant 0 : index
    %c0_1 = arith.constant 0 : index
    %0 = vector.load %arg1[%c0, %c0_0, %c0_1] : memref<1x4x64xf32, #tpu.memory_space<vmem>>, vector<1x4x64xf32>
    %1 = vector.shape_cast %0 : vector<1x4x64xf32> to vector<4x64xf32>
    %2 = arith.truncf %1 : vector<4x64xf32> to vector<4x64xbf16>
    %c0_2 = arith.constant 0 : index
    %c0_3 = arith.constant 0 : index
    %3 = vector.load %arg3[%c0_2, %c0_3] : memref<64x256xbf16, #tpu.memory_space<vmem>>, vector<64x256xbf16>
    %cst = arith.constant dense<0.000000e+00> : vector<4x256xf32>
    %4 = tpu.matmul %2, %3, %cst {dimension_numbers = #tpu.dot_dimension_numbers<[1], [0], [0], [1], [0, 0, 1, 1], [], []>} : vector<4x64xbf16>, vector<64x256xbf16>, vector<4x256xf32> -> vector<4x256xf32>
    %c0_4 = arith.constant 0 : index
    %c0_5 = arith.constant 0 : index
    %c0_6 = arith.constant 0 : index
    %5 = vector.load %arg2[%c0_4, %c0_5, %c0_6] : memref<1x4x256xf32, #tpu.memory_space<vmem>>, vector<1x4x256xf32>
    %6 = vector.shape_cast %5 : vector<1x4x256xf32> to vector<4x256xf32>
    %7 = arith.truncf %6 : vector<4x256xf32> to vector<4x256xbf16>
    %8 = arith.truncf %4 : vector<4x256xf32> to vector<4x256xbf16>
    %9 = tpu.concatenate %7, %8 in 0 : vector<4x256xbf16>, vector<4x256xbf16> -> vector<8x256xbf16>
    %10 = tpu.iota {dimensions = array<i32: 1>} : vector<1x256xi32>
    %c16_i32 = arith.constant 16 : i32
    %c0_i32 = arith.constant 0 : i32
    %11 = arith.cmpi eq, %c16_i32, %c0_i32 : i32
    %c1_i32 = arith.constant 1 : i32
    %12 = arith.select %11, %c1_i32, %c16_i32 : i32
    %13 = vector.broadcast %12 : i32 to vector<1x256xi32>
    %14 = arith.remsi %10, %13 : vector<1x256xi32>
    %c0_i32_7 = arith.constant 0 : i32
    %15 = vector.broadcast %c0_i32_7 : i32 to vector<1x256xi32>
    %16 = arith.cmpi ne, %14, %15 : vector<1x256xi32>
    %c0_i32_8 = arith.constant 0 : i32
    %17 = vector.broadcast %c0_i32_8 : i32 to vector<1x256xi32>
    %18 = arith.cmpi slt, %14, %17 : vector<1x256xi32>
    %c0_i32_9 = arith.constant 0 : i32
    %19 = arith.cmpi slt, %12, %c0_i32_9 : i32
    %20 = vector.broadcast %19 : i1 to vector<1x256xi1>
    %21 = vector.broadcast %20 : vector<1x256xi1> to vector<1x256xi1>
    %22 = arith.xori %18, %21 : vector<1x256xi1>
    %23 = arith.andi %22, %16 : vector<1x256xi1>
    %24 = vector.broadcast %12 : i32 to vector<1x256xi32>
    %25 = arith.addi %14, %24 : vector<1x256xi32>
    %26 = arith.select %23, %25, %14 : vector<1x256xi1>, vector<1x256xi32>
    %c0_i32_10 = arith.constant 0 : i32
    %27 = vector.broadcast %c0_i32_10 : i32 to vector<1x256xi32>
    %28 = arith.cmpi sgt, %26, %27 : vector<1x256xi32>
    %c15_i32 = arith.constant 15 : i32
    %29 = vector.broadcast %c15_i32 : i32 to vector<1x256xi32>
    %30 = arith.cmpi slt, %26, %29 : vector<1x256xi32>
    %cst_11 = arith.constant 0.000000e+00 : bf16
    %31 = vector.broadcast %cst_11 : bf16 to vector<8x1xbf16>
    %32 = vector.extract_strided_slice %9 {offsets = [0, 0], sizes = [8, 255], strides = [1, 1]} : vector<8x256xbf16> to vector<8x255xbf16>
    %33 = tpu.concatenate %31, %32 in 1 : vector<8x1xbf16>, vector<8x255xbf16> -> vector<8x256xbf16>
    %cst_12 = arith.constant 0.000000e+00 : bf16
    %34 = vector.broadcast %cst_12 : bf16 to vector<8x256xbf16>
    %35 = vector.shape_cast %28 : vector<1x256xi1> to vector<1x256xi1>
    %36 = vector.broadcast %35 : vector<1x256xi1> to vector<8x256xi1>
    %37 = arith.select %36, %33, %34 : vector<8x256xi1>, vector<8x256xbf16>
    %cst_13 = arith.constant 0.000000e+00 : bf16
    %38 = vector.broadcast %cst_13 : bf16 to vector<8x1xbf16>
    %39 = vector.extract_strided_slice %9 {offsets = [0, 1], sizes = [8, 255], strides = [1, 1]} : vector<8x256xbf16> to vector<8x255xbf16>
    %40 = tpu.concatenate %39, %38 in 1 : vector<8x255xbf16>, vector<8x1xbf16> -> vector<8x256xbf16>
    %cst_14 = arith.constant 0.000000e+00 : bf16
    %41 = vector.broadcast %cst_14 : bf16 to vector<8x256xbf16>
    %42 = vector.shape_cast %30 : vector<1x256xi1> to vector<1x256xi1>
    %43 = vector.broadcast %42 : vector<1x256xi1> to vector<8x256xi1>
    %44 = arith.select %43, %40, %41 : vector<8x256xi1>, vector<8x256xbf16>
    %45 = tpu.concatenate %37, %9, %44 in 0 : vector<8x256xbf16>, vector<8x256xbf16>, vector<8x256xbf16> -> vector<24x256xbf16>
    %cst_15 = arith.constant 0.000000e+00 : f32
    %46 = vector.broadcast %cst_15 : f32 to vector<4x256xf32>
    %cst_16 = arith.constant 0.000000e+00 : bf16
    %47 = vector.broadcast %cst_16 : bf16 to vector<24x16xbf16>
    %48 = vector.extract_strided_slice %45 {offsets = [0, 0], sizes = [24, 240], strides = [1, 1]} : vector<24x256xbf16> to vector<24x240xbf16>
    %49 = tpu.concatenate %47, %48 in 1 : vector<24x16xbf16>, vector<24x240xbf16> -> vector<24x256xbf16>
    %c0_17 = arith.constant 0 : index
    %c0_18 = arith.constant 0 : index
    %c0_19 = arith.constant 0 : index
    %50 = vector.load %arg4[%c0_17, %c0_18, %c0_19] : memref<3x4x24xbf16, #tpu.memory_space<vmem>>, vector<1x4x24xbf16>
    %51 = vector.shape_cast %50 : vector<1x4x24xbf16> to vector<4x24xbf16>
    %cst_20 = arith.constant dense<0.000000e+00> : vector<4x256xf32>
    %52 = tpu.matmul %51, %49, %cst_20 {dimension_numbers = #tpu.dot_dimension_numbers<[1], [0], [0], [1], [0, 0, 1, 1], [], []>} : vector<4x24xbf16>, vector<24x256xbf16>, vector<4x256xf32> -> vector<4x256xf32>
    %53 = arith.addf %46, %52 : vector<4x256xf32>
    %c1 = arith.constant 1 : index
    %c0_21 = arith.constant 0 : index
    %c0_22 = arith.constant 0 : index
    %54 = vector.load %arg4[%c1, %c0_21, %c0_22] : memref<3x4x24xbf16, #tpu.memory_space<vmem>>, vector<1x4x24xbf16>
    %55 = vector.shape_cast %54 : vector<1x4x24xbf16> to vector<4x24xbf16>
    %cst_23 = arith.constant dense<0.000000e+00> : vector<4x256xf32>
    %56 = tpu.matmul %55, %45, %cst_23 {dimension_numbers = #tpu.dot_dimension_numbers<[1], [0], [0], [1], [0, 0, 1, 1], [], []>} : vector<4x24xbf16>, vector<24x256xbf16>, vector<4x256xf32> -> vector<4x256xf32>
    %57 = arith.addf %53, %56 : vector<4x256xf32>
    %cst_24 = arith.constant 0.000000e+00 : bf16
    %58 = vector.broadcast %cst_24 : bf16 to vector<24x16xbf16>
    %59 = vector.extract_strided_slice %45 {offsets = [0, 16], sizes = [24, 240], strides = [1, 1]} : vector<24x256xbf16> to vector<24x240xbf16>
    %60 = tpu.concatenate %59, %58 in 1 : vector<24x240xbf16>, vector<24x16xbf16> -> vector<24x256xbf16>
    %c2 = arith.constant 2 : index
    %c0_25 = arith.constant 0 : index
    %c0_26 = arith.constant 0 : index
    %61 = vector.load %arg4[%c2, %c0_25, %c0_26] : memref<3x4x24xbf16, #tpu.memory_space<vmem>>, vector<1x4x24xbf16>
    %62 = vector.shape_cast %61 : vector<1x4x24xbf16> to vector<4x24xbf16>
    %cst_27 = arith.constant dense<0.000000e+00> : vector<4x256xf32>
    %63 = tpu.matmul %62, %60, %cst_27 {dimension_numbers = #tpu.dot_dimension_numbers<[1], [0], [0], [1], [0, 0, 1, 1], [], []>} : vector<4x24xbf16>, vector<24x256xbf16>, vector<4x256xf32> -> vector<4x256xf32>
    %64 = arith.addf %57, %63 : vector<4x256xf32>
    %c0_28 = arith.constant 0 : index
    %c0_29 = arith.constant 0 : index
    %65 = vector.load %arg5[%c0_28, %c0_29] : memref<4x1xf32, #tpu.memory_space<vmem>>, vector<4x1xf32>
    %66 = vector.broadcast %65 : vector<4x1xf32> to vector<4x256xf32>
    %67 = arith.addf %64, %66 : vector<4x256xf32>
    %cst_30 = arith.constant 0.000000e+00 : f32
    %68 = vector.broadcast %cst_30 : f32 to vector<4x256xf32>
    %69 = arith.maximumf %67, %68 : vector<4x256xf32>
    %70 = arith.truncf %69 : vector<4x256xf32> to vector<4x256xbf16>
    %cst_31 = arith.constant 0.000000e+00 : bf16
    %71 = vector.broadcast %cst_31 : bf16 to vector<4x1xbf16>
    %72 = vector.extract_strided_slice %70 {offsets = [0, 0], sizes = [4, 255], strides = [1, 1]} : vector<4x256xbf16> to vector<4x255xbf16>
    %73 = tpu.concatenate %71, %72 in 1 : vector<4x1xbf16>, vector<4x255xbf16> -> vector<4x256xbf16>
    %cst_32 = arith.constant 0.000000e+00 : bf16
    %74 = vector.broadcast %cst_32 : bf16 to vector<4x256xbf16>
    %75 = vector.shape_cast %28 : vector<1x256xi1> to vector<1x256xi1>
    %76 = vector.broadcast %75 : vector<1x256xi1> to vector<4x256xi1>
    %77 = arith.select %76, %73, %74 : vector<4x256xi1>, vector<4x256xbf16>
    %cst_33 = arith.constant 0.000000e+00 : bf16
    %78 = vector.broadcast %cst_33 : bf16 to vector<4x1xbf16>
    %79 = vector.extract_strided_slice %70 {offsets = [0, 1], sizes = [4, 255], strides = [1, 1]} : vector<4x256xbf16> to vector<4x255xbf16>
    %80 = tpu.concatenate %79, %78 in 1 : vector<4x255xbf16>, vector<4x1xbf16> -> vector<4x256xbf16>
    %cst_34 = arith.constant 0.000000e+00 : bf16
    %81 = vector.broadcast %cst_34 : bf16 to vector<4x256xbf16>
    %82 = vector.shape_cast %30 : vector<1x256xi1> to vector<1x256xi1>
    %83 = vector.broadcast %82 : vector<1x256xi1> to vector<4x256xi1>
    %84 = arith.select %83, %80, %81 : vector<4x256xi1>, vector<4x256xbf16>
    %85 = tpu.concatenate %77, %70, %84 in 0 : vector<4x256xbf16>, vector<4x256xbf16>, vector<4x256xbf16> -> vector<12x256xbf16>
    %cst_35 = arith.constant 0.000000e+00 : f32
    %86 = vector.broadcast %cst_35 : f32 to vector<4x256xf32>
    %cst_36 = arith.constant 0.000000e+00 : bf16
    %87 = vector.broadcast %cst_36 : bf16 to vector<12x16xbf16>
    %88 = vector.extract_strided_slice %85 {offsets = [0, 0], sizes = [12, 240], strides = [1, 1]} : vector<12x256xbf16> to vector<12x240xbf16>
    %89 = tpu.concatenate %87, %88 in 1 : vector<12x16xbf16>, vector<12x240xbf16> -> vector<12x256xbf16>
    %c0_37 = arith.constant 0 : index
    %c0_38 = arith.constant 0 : index
    %c0_39 = arith.constant 0 : index
    %90 = vector.load %arg6[%c0_37, %c0_38, %c0_39] : memref<3x4x12xbf16, #tpu.memory_space<vmem>>, vector<1x4x12xbf16>
    %91 = vector.shape_cast %90 : vector<1x4x12xbf16> to vector<4x12xbf16>
    %cst_40 = arith.constant dense<0.000000e+00> : vector<4x256xf32>
    %92 = tpu.matmul %91, %89, %cst_40 {dimension_numbers = #tpu.dot_dimension_numbers<[1], [0], [0], [1], [0, 0, 1, 1], [], []>} : vector<4x12xbf16>, vector<12x256xbf16>, vector<4x256xf32> -> vector<4x256xf32>
    %93 = arith.addf %86, %92 : vector<4x256xf32>
    %c1_41 = arith.constant 1 : index
    %c0_42 = arith.constant 0 : index
    %c0_43 = arith.constant 0 : index
    %94 = vector.load %arg6[%c1_41, %c0_42, %c0_43] : memref<3x4x12xbf16, #tpu.memory_space<vmem>>, vector<1x4x12xbf16>
    %95 = vector.shape_cast %94 : vector<1x4x12xbf16> to vector<4x12xbf16>
    %cst_44 = arith.constant dense<0.000000e+00> : vector<4x256xf32>
    %96 = tpu.matmul %95, %85, %cst_44 {dimension_numbers = #tpu.dot_dimension_numbers<[1], [0], [0], [1], [0, 0, 1, 1], [], []>} : vector<4x12xbf16>, vector<12x256xbf16>, vector<4x256xf32> -> vector<4x256xf32>
    %97 = arith.addf %93, %96 : vector<4x256xf32>
    %cst_45 = arith.constant 0.000000e+00 : bf16
    %98 = vector.broadcast %cst_45 : bf16 to vector<12x16xbf16>
    %99 = vector.extract_strided_slice %85 {offsets = [0, 16], sizes = [12, 240], strides = [1, 1]} : vector<12x256xbf16> to vector<12x240xbf16>
    %100 = tpu.concatenate %99, %98 in 1 : vector<12x240xbf16>, vector<12x16xbf16> -> vector<12x256xbf16>
    %c2_46 = arith.constant 2 : index
    %c0_47 = arith.constant 0 : index
    %c0_48 = arith.constant 0 : index
    %101 = vector.load %arg6[%c2_46, %c0_47, %c0_48] : memref<3x4x12xbf16, #tpu.memory_space<vmem>>, vector<1x4x12xbf16>
    %102 = vector.shape_cast %101 : vector<1x4x12xbf16> to vector<4x12xbf16>
    %cst_49 = arith.constant dense<0.000000e+00> : vector<4x256xf32>
    %103 = tpu.matmul %102, %100, %cst_49 {dimension_numbers = #tpu.dot_dimension_numbers<[1], [0], [0], [1], [0, 0, 1, 1], [], []>} : vector<4x12xbf16>, vector<12x256xbf16>, vector<4x256xf32> -> vector<4x256xf32>
    %104 = arith.addf %97, %103 : vector<4x256xf32>
    %c0_50 = arith.constant 0 : index
    %c0_51 = arith.constant 0 : index
    %105 = vector.load %arg7[%c0_50, %c0_51] : memref<4x1xf32, #tpu.memory_space<vmem>>, vector<4x1xf32>
    %106 = vector.broadcast %105 : vector<4x1xf32> to vector<4x256xf32>
    %107 = arith.addf %104, %106 : vector<4x256xf32>
    %cst_52 = arith.constant 0.000000e+00 : f32
    %108 = vector.broadcast %cst_52 : f32 to vector<4x256xf32>
    %109 = arith.maximumf %107, %108 : vector<4x256xf32>
    %c0_53 = arith.constant 0 : index
    %c0_54 = arith.constant 0 : index
    %c0_55 = arith.constant 0 : index
    %110 = vector.load %arg8[%c0_53, %c0_54, %c0_55] : memref<1x4x256xf32, #tpu.memory_space<vmem>>, vector<1x4x256xf32>
    %111 = vector.shape_cast %110 : vector<1x4x256xf32> to vector<4x256xf32>
    %112 = vector.shape_cast %109 : vector<4x256xf32> to vector<1x4x256xf32>
    tpu.vector_store %arg8[%c0_53, %c0_54, %c0_55], %112 {strides = array<i32>} : memref<1x4x256xf32, #tpu.memory_space<vmem>>, vector<1x4x256xf32>,
    return
  }
  func.func @transform_0(%arg0: i32) -> (i32, i32, i32) {
    %c0_i32 = arith.constant 0 : i32
    %c0_i32_0 = arith.constant 0 : i32
    %c0_i32_1 = arith.constant 0 : i32
    return %arg0, %c0_i32, %c0_i32_0 : i32, i32, i32
  }
  func.func @transform_1(%arg0: i32) -> (i32, i32, i32) {
    %c0_i32 = arith.constant 0 : i32
    %c0_i32_0 = arith.constant 0 : i32
    %c0_i32_1 = arith.constant 0 : i32
    return %arg0, %c0_i32, %c0_i32_0 : i32, i32, i32
  }
  func.func @transform_2(%arg0: i32) -> (i32, i32) {
    %c0_i32 = arith.constant 0 : i32
    %c0_i32_0 = arith.constant 0 : i32
    %c0_i32_1 = arith.constant 0 : i32
    return %c0_i32, %c0_i32_0 : i32, i32
  }
  func.func @transform_3(%arg0: i32) -> (i32, i32, i32) {
    %c0_i32 = arith.constant 0 : i32
    %c0_i32_0 = arith.constant 0 : i32
    %c0_i32_1 = arith.constant 0 : i32
    %c0_i32_2 = arith.constant 0 : i32
    return %c0_i32, %c0_i32_0, %c0_i32_1 : i32, i32, i32
  }
  func.func @transform_4(%arg0: i32) -> (i32, i32) {
    %c0_i32 = arith.constant 0 : i32
    %c0_i32_0 = arith.constant 0 : i32
    %c0_i32_1 = arith.constant 0 : i32
    return %c0_i32, %c0_i32_0 : i32, i32
  }
  func.func @transform_5(%arg0: i32) -> (i32, i32, i32) {
    %c0_i32 = arith.constant 0 : i32
    %c0_i32_0 = arith.constant 0 : i32
    %c0_i32_1 = arith.constant 0 : i32
    %c0_i32_2 = arith.constant 0 : i32
    return %c0_i32, %c0_i32_0, %c0_i32_1 : i32, i32, i32
  }
  func.func @transform_6(%arg0: i32) -> (i32, i32) {
    %c0_i32 = arith.constant 0 : i32
    %c0_i32_0 = arith.constant 0 : i32
    %c0_i32_1 = arith.constant 0 : i32
    return %c0_i32, %c0_i32_0 : i32, i32
  }
  func.func @transform_7(%arg0: i32) -> (i32, i32, i32) {
    %c0_i32 = arith.constant 0 : i32
    %c0_i32_0 = arith.constant 0 : i32
    %c0_i32_1 = arith.constant 0 : i32
    return %arg0, %c0_i32, %c0_i32_0 : i32, i32, i32
  }
}

</mosaic_0001>

<llo_original>
// kernel: high_res_up_forward.1
$region0: #{high_res_up_forward.1}
  #allocation0 [shape = 'u32[]', space=smem, size = 0x4, offset = 0x4, fixed_abs, tag = 'smem constant byte address 0x4 - core index']
  #allocation1 [shape = 'u32[144,128]{1,0:T(1,128)}', space=vmem, size = 0x12000, scoped, tag = 'internal scratch']
  %s0 = inlined_call_operand.vmem [shape: f32[2,4,64], index: 0, kind: input, shape index: {}]
  %s1 = inlined_call_operand.vmem [shape: f32[2,4,256], index: 1, kind: input, shape index: {}]
  %s2 = inlined_call_operand.vmem [shape: bf16[64,256], index: 2, kind: input, shape index: {}]
  %s3 = inlined_call_operand.vmem [shape: bf16[3,4,24], index: 3, kind: input, shape index: {}]
  %s4 = inlined_call_operand.vmem [shape: f32[4,1], index: 4, kind: input, shape index: {}]
  %s5 = inlined_call_operand.vmem [shape: bf16[3,4,12], index: 5, kind: input, shape index: {}]
  %s6 = inlined_call_operand.vmem [shape: f32[4,1], index: 6, kind: input, shape index: {}]
  %s7 = inlined_call_operand.vmem [shape: f32[2,4,256], index: 7, kind: output, shape index: {}]
  %s8 = sld [smem:[#allocation0]]
  $region61: #{high_res_up_forward.1} parent=0
    _
  %s10 = ssub.s32 1, %s8
  %s11 = scalar_select 0, %s10, %s8
  loop: start=0, step=1, limit=4
  $region2: #{high_res_up_forward.1} parent=0 // loop_pre_header
    _
  $region3: #{high_res_up_forward.1} parent=0 // loop_header
    %s13 = sphi 0, %s17
    %p14 = scmp.ge.s32.totalorder %s13, 4
    %s23 = sphi 0, %s25
    %s26 = sphi 0, %s23
    %s27 = sphi 0, %s26
    %s43 = sphi 0, %s27
    %s49 = sphi 0, %s51
    %s52 = sphi 0, %s49
    %s53 = sphi 0, %s52
    %s69 = sphi 0, %s53
    %s73 = sphi 0, %s73
    %s75 = sphi 0, %s73
    %s76 = sphi 0, %s75
    %s90 = sphi 0, %s76
    %s94 = sphi 0, %s94
    %s96 = sphi 0, %s94
    %s97 = sphi 0, %s96
    %s111 = sphi 0, %s97
    %s115 = sphi 0, %s115
    %s117 = sphi 0, %s115
    %s118 = sphi 0, %s117
    %s132 = sphi 0, %s118
    %s136 = sphi 0, %s136
    %s138 = sphi 0, %s136
    %s139 = sphi 0, %s138
    %s153 = sphi 0, %s139
    %s157 = sphi 0, %s157
    %s159 = sphi 0, %s157
    %s160 = sphi 0, %s159
    %s174 = sphi 0, %s160
    %s180 = sphi 0, %s182
    %s183 = sphi 0, %s180
    %s184 = sphi 0, %s183
    %s200 = sphi 0, %s184
  $region4: #{high_res_up_forward.1} parent=0 // loop_header_branch
    %16 = sbr.rel (%p14) target = $region8
  $region5: #{high_res_up_forward.1} parent=0 // loop_body
    %s18 = ssub.s32 %s13, 1
    %s19 = ssub.s32 %s13, 2
    %s20 = sadd.s32 %s13, 1
    %s21 = ssub.s32 %s13, %s20
    %p22 = scmp.eq.s32.totalorder %s21, 0
    %s24 = sadd.s32 %s23, 1
    %s25 = scalar_select %p22, %s23, %s24
    %p28 = pneg %p22
    %p29 = scmp.eq.s32.totalorder %s13, 1
    %p30 = por %p28, %p29
    %p31 = scmp.ne.s32.totalorder %s23, %s26
    %p32 = scmp.eq.s32.totalorder %s13, 0
    %p33 = por %p31, %p32
    %p34 = scmp.ne.s32.totalorder %s23, %s26
    %p35 = scmp.eq.s32.totalorder %s18, 1
    %p36 = por %p34, %p35
    %p37 = scmp.ne.s32.totalorder %s26, %s27
    %p38 = scmp.eq.s32.totalorder %s18, 0
    %p39 = por %p37, %p38
    %p40 = scmp.ne.s32.totalorder %s26, %s27
    %p41 = scmp.eq.s32.totalorder %s19, 1
    %p42 = por %p40, %p41
    %p44 = scmp.ne.s32.totalorder %s27, %s43
    %p45 = scmp.eq.s32.totalorder %s19, 0
    %p46 = por %p44, %p45
    %s47 = ssub.s32 %s13, %s20
    %p48 = scmp.eq.s32.totalorder %s47, 0
    %s50 = sadd.s32 %s49, 1
    %s51 = scalar_select %p48, %s49, %s50
    %p54 = pneg %p48
    %p55 = scmp.eq.s32.totalorder %s13, 1
    %p56 = por %p54, %p55
    %p57 = scmp.ne.s32.totalorder %s49, %s52
    %p58 = scmp.eq.s32.totalorder %s13, 0
    %p59 = por %p57, %p58
    %p60 = scmp.ne.s32.totalorder %s49, %s52
    %p61 = scmp.eq.s32.totalorder %s18, 1
    %p62 = por %p60, %p61
    %p63 = scmp.ne.s32.totalorder %s52, %s53
    %p64 = scmp.eq.s32.totalorder %s18, 0
    %p65 = por %p63, %p64
    %p66 = scmp.ne.s32.totalorder %s52, %s53
    %p67 = scmp.eq.s32.totalorder %s19, 1
    %p68 = por %p66, %p67
    %p70 = scmp.ne.s32.totalorder %s53, %s69
    %p71 = scmp.eq.s32.totalorder %s19, 0
    %p72 = por %p70, %p71
    %s74 = sadd.s32 %s73, 1
    %p77 = scmp.eq.s32.totalorder %s13, 1
    %p78 = scmp.ne.s32.totalorder %s73, %s75
    %p79 = scmp.eq.s32.totalorder %s13, 0
    %p80 = por %p78, %p79
    %p81 = scmp.ne.s32.totalorder %s73, %s75
    %p82 = scmp.eq.s32.totalorder %s18, 1
    %p83 = por %p81, %p82
    %p84 = scmp.ne.s32.totalorder %s75, %s76
    %p85 = scmp.eq.s32.totalorder %s18, 0
    %p86 = por %p84, %p85
    %p87 = scmp.ne.s32.totalorder %s75, %s76
    %p88 = scmp.eq.s32.totalorder %s19, 1
    %p89 = por %p87, %p88
    %p91 = scmp.ne.s32.totalorder %s76, %s90
    %p92 = scmp.eq.s32.totalorder %s19, 0
    %p93 = por %p91, %p92
    %s95 = sadd.s32 %s94, 1
    %p98 = scmp.eq.s32.totalorder %s13, 1
    %p99 = scmp.ne.s32.totalorder %s94, %s96
    %p100 = scmp.eq.s32.totalorder %s13, 0
    %p101 = por %p99, %p100
    %p102 = scmp.ne.s32.totalorder %s94, %s96
    %p103 = scmp.eq.s32.totalorder %s18, 1
    %p104 = por %p102, %p103
    %p105 = scmp.ne.s32.totalorder %s96, %s97
    %p106 = scmp.eq.s32.totalorder %s18, 0
    %p107 = por %p105, %p106
    %p108 = scmp.ne.s32.totalorder %s96, %s97
    %p109 = scmp.eq.s32.totalorder %s19, 1
    %p110 = por %p108, %p109
    %p112 = scmp.ne.s32.totalorder %s97, %s111
    %p113 = scmp.eq.s32.totalorder %s19, 0
    %p114 = por %p112, %p113
    %s116 = sadd.s32 %s115, 1
    %p119 = scmp.eq.s32.totalorder %s13, 1
    %p120 = scmp.ne.s32.totalorder %s115, %s117
    %p121 = scmp.eq.s32.totalorder %s13, 0
    %p122 = por %p120, %p121
    %p123 = scmp.ne.s32.totalorder %s115, %s117
    %p124 = scmp.eq.s32.totalorder %s18, 1
    %p125 = por %p123, %p124
    %p126 = scmp.ne.s32.totalorder %s117, %s118
    %p127 = scmp.eq.s32.totalorder %s18, 0
    %p128 = por %p126, %p127
    %p129 = scmp.ne.s32.totalorder %s117, %s118
    %p130 = scmp.eq.s32.totalorder %s19, 1
    %p131 = por %p129, %p130
    %p133 = scmp.ne.s32.totalorder %s118, %s132
    %p134 = scmp.eq.s32.totalorder %s19, 0
    %p135 = por %p133, %p134
    %s137 = sadd.s32 %s136, 1
    %p140 = scmp.eq.s32.totalorder %s13, 1
    %p141 = scmp.ne.s32.totalorder %s136, %s138
    %p142 = scmp.eq.s32.totalorder %s13, 0
    %p143 = por %p141, %p142
    %p144 = scmp.ne.s32.totalorder %s136, %s138
    %p145 = scmp.eq.s32.totalorder %s18, 1
    %p146 = por %p144, %p145
    %p147 = scmp.ne.s32.totalorder %s138, %s139
    %p148 = scmp.eq.s32.totalorder %s18, 0
    %p149 = por %p147, %p148
    %p150 = scmp.ne.s32.totalorder %s138, %s139
    %p151 = scmp.eq.s32.totalorder %s19, 1
    %p152 = por %p150, %p151
    %p154 = scmp.ne.s32.totalorder %s139, %s153
    %p155 = scmp.eq.s32.totalorder %s19, 0
    %p156 = por %p154, %p155
    %s158 = sadd.s32 %s157, 1
    %p161 = scmp.eq.s32.totalorder %s13, 1
    %p162 = scmp.ne.s32.totalorder %s157, %s159
    %p163 = scmp.eq.s32.totalorder %s13, 0
    %p164 = por %p162, %p163
    %p165 = scmp.ne.s32.totalorder %s157, %s159
    %p166 = scmp.eq.s32.totalorder %s18, 1
    %p167 = por %p165, %p166
    %p168 = scmp.ne.s32.totalorder %s159, %s160
    %p169 = scmp.eq.s32.totalorder %s18, 0
    %p170 = por %p168, %p169
    %p171 = scmp.ne.s32.totalorder %s159, %s160
    %p172 = scmp.eq.s32.totalorder %s19, 1
    %p173 = por %p171, %p172
    %p175 = scmp.ne.s32.totalorder %s160, %s174
    %p176 = scmp.eq.s32.totalorder %s19, 0
    %p177 = por %p175, %p176
    %s178 = ssub.s32 %s13, %s20
    %p179 = scmp.eq.s32.totalorder %s178, 0
    %s181 = sadd.s32 %s180, 1
    %s182 = scalar_select %p179, %s180, %s181
    %p185 = pneg %p179
    %p186 = scmp.eq.s32.totalorder %s13, 1
    %p187 = por %p185, %p186
    %p188 = scmp.ne.s32.totalorder %s180, %s183
    %p189 = scmp.eq.s32.totalorder %s13, 0
    %p190 = por %p188, %p189
    %p191 = scmp.ne.s32.totalorder %s180, %s183
    %p192 = scmp.eq.s32.totalorder %s18, 1
    %p193 = por %p191, %p192
    %p194 = scmp.ne.s32.totalorder %s183, %s184
    %p195 = scmp.eq.s32.totalorder %s18, 0
    %p196 = por %p194, %p195
    %p197 = scmp.ne.s32.totalorder %s183, %s184
    %p198 = scmp.eq.s32.totalorder %s19, 1
    %p199 = por %p197, %p198
    %p201 = scmp.ne.s32.totalorder %s184, %s200
    %p202 = scmp.eq.s32.totalorder %s19, 0
    %p203 = por %p201, %p202
    %p204 = scmp.le.s32.totalorder 1, %s13
    %p205 = scmp.lt.s32.totalorder %s13, 3
    %p206 = pnand %p204, %p205
    %p207 = pneg %p206
    // Predicated region
    $region9: #{high_res_up_forward.1} parent=5 // pred_check
      _
    $region10: #{high_res_up_forward.1} parent=5 // pred_check_branch
      %209 = sbr.rel (%p206) target = $region12
    $region11: #{high_res_up_forward.1} parent=5 // pred_region
      %s210 = ssub.s32 %s13, 1
      // Predicated region
      $region13: #{high_res_up_forward.1} parent=11 // pred_check
        %p211 = pneg %p86
      $region14: #{high_res_up_forward.1} parent=11 // pred_check_branch
        %213 = sbr.rel (%p211) target = $region16
      $region15: #{high_res_up_forward.1} parent=11 // pred_region
        _
      $region16: #{high_res_up_forward.1} parent=11 // pred_fallthru
        _
      // Predicated region
      $region17: #{high_res_up_forward.1} parent=11 // pred_check
        %p214 = pneg %p107
      $region18: #{high_res_up_forward.1} parent=11 // pred_check_branch
        %216 = sbr.rel (%p214) target = $region20
      $region19: #{high_res_up_forward.1} parent=11 // pred_region
        _
      $region20: #{high_res_up_forward.1} parent=11 // pred_fallthru
        _
      // Predicated region
      $region21: #{high_res_up_forward.1} parent=11 // pred_check
        %p217 = pneg %p128
      $region22: #{high_res_up_forward.1} parent=11 // pred_check_branch
        %219 = sbr.rel (%p217) target = $region24
      $region23: #{high_res_up_forward.1} parent=11 // pred_region
        _
      $region24: #{high_res_up_forward.1} parent=11 // pred_fallthru
        _
      // Predicated region
      $region25: #{high_res_up_forward.1} parent=11 // pred_check
        %p220 = pneg %p149
      $region26: #{high_res_up_forward.1} parent=11 // pred_check_branch
        %222 = sbr.rel (%p220) target = $region28
      $region27: #{high_res_up_forward.1} parent=11 // pred_region
        _
      $region28: #{high_res_up_forward.1} parent=11 // pred_fallthru
        _
      // Predicated region
      $region29: #{high_res_up_forward.1} parent=11 // pred_check
        %p223 = pneg %p170
      $region30: #{high_res_up_forward.1} parent=11 // pred_check_branch
        %225 = sbr.rel (%p223) target = $region32
      $region31: #{high_res_up_forward.1} parent=11 // pred_region
        _
      $region32: #{high_res_up_forward.1} parent=11 // pred_fallthru
        _
    $region12: #{high_res_up_forward.1} parent=5 // pred_fallthru
      _
    %p226 = scmp.lt.s32.totalorder %s13, 2
    // Predicated region
    $region33: #{high_res_up_forward.1} parent=5 // pred_check
      %p227 = pneg %p226
    $region34: #{high_res_up_forward.1} parent=5 // pred_check_branch
      %229 = sbr.rel (%p227) target = $region36
    $region35: #{high_res_up_forward.1} parent=5 // pred_region
      // Predicated region
      $region37: #{high_res_up_forward.1} parent=35 // pred_check
        %p230 = pneg %p33
      $region38: #{high_res_up_forward.1} parent=35 // pred_check_branch
        %232 = sbr.rel (%p230) target = $region40
      $region39: #{high_res_up_forward.1} parent=35 // pred_region
        %p233 = scmp.lt.s32.totalorder %s13, 1
        %s234 = scalar_select %p233, %s13, 1
        %s235 = smul.addr %s234, 4
        %s236 = scalar_lea.vmem %s0, %s235
      $region40: #{high_res_up_forward.1} parent=35 // pred_fallthru
        _
      // Predicated region
      $region41: #{high_res_up_forward.1} parent=35 // pred_check
        %p237 = pneg %p59
      $region42: #{high_res_up_forward.1} parent=35 // pred_check_branch
        %239 = sbr.rel (%p237) target = $region44
      $region43: #{high_res_up_forward.1} parent=35 // pred_region
        %p240 = scmp.lt.s32.totalorder %s13, 1
        %s241 = scalar_select %p240, %s13, 1
        %s242 = smul.addr %s241, 2
        %s243 = smul.addr %s242, 4
        %s244 = scalar_lea.vmem %s1, %s243
      $region44: #{high_res_up_forward.1} parent=35 // pred_fallthru
        _
    $region36: #{high_res_up_forward.1} parent=5 // pred_fallthru
      _
    %p245 = scmp.le.s32.totalorder 1, %s13
    %p246 = scmp.lt.s32.totalorder %s13, 3
    %p247 = pnand %p245, %p246
    %p248 = pneg %p247
    // Predicated region
    $region45: #{high_res_up_forward.1} parent=5 // pred_check
      _
    $region46: #{high_res_up_forward.1} parent=5 // pred_check_branch
      %250 = sbr.rel (%p247) target = $region48
    $region47: #{high_res_up_forward.1} parent=5 // pred_region
      %s251 = ssub.s32 %s13, 1
      %p252 = scmp.lt.s32.totalorder %s18, 1
      %s253 = scalar_select %p252, %s18, 1
      %s254 = smul.addr %s253, 4
      %s255 = scalar_lea.vmem %s0, %s254
      %p256 = pneg %p39
      %p257 = pneg %p36
      %p258 = scmp.lt.s32.totalorder %s18, 1
      %s259 = scalar_select %p258, %s18, 1
      %s260 = smul.addr %s259, 2
      %s261 = smul.addr %s260, 4
      %s262 = scalar_lea.vmem %s1, %s261
      %p263 = pneg %p65
      %p264 = pneg %p62
      %p265 = pneg %p86
      %p266 = pneg %p83
      %p267 = pneg %p107
      %p268 = pneg %p104
      %p269 = pneg %p128
      %p270 = pneg %p125
      %p271 = pneg %p149
      %p272 = pneg %p146
      %p273 = pneg %p170
      %p274 = pneg %p167
      %p275 = pneg %p196
      %p276 = pneg %p193
      %p277 = scmp.lt.s32.totalorder %s18, 1
      %s278 = scalar_select %p277, %s18, 1
      %s279 = smul.addr %s278, 2
      %s280 = smul.addr %s279, 4
      %s281 = scalar_lea.vmem %s7, %s280
      %p282 = scmp.lt.s32.totalorder %s18, 1
      %s283 = scalar_select %p282, %s18, 1
      %s284 = smul.addr %s283, 4
      %s285 = scalar_lea.vmem %s0, %s284
      %p286 = scmp.lt.s32.totalorder %s18, 1
      %s287 = scalar_select %p286, %s18, 1
      %s288 = smul.addr %s287, 2
      %s289 = smul.addr %s288, 4
      %s290 = scalar_lea.vmem %s1, %s289
      %p291 = scmp.lt.s32.totalorder %s18, 1
      %s292 = scalar_select %p291, %s18, 1
      %s293 = smul.addr %s292, 2
      %s294 = smul.addr %s293, 4
      %s295 = scalar_lea.vmem %s7, %s294
      %v299 = vld [vmem:[%s285] sm:$0xf]
      %v300 = vpack.c.bf16 %v299, %v299
      %v301 = vld [vmem:[%s2] sm:$0xff]
      %v302 = vld [vmem:[%s2 + $0x8] sm:$0xff]
      %v303 = vld [vmem:[%s2 + $0x10] sm:$0xff]
      %v304 = vld [vmem:[%s2 + $0x18] sm:$0xff]
      %v305 = vld [vmem:[%s2 + $0x20] sm:$0xff]
      %v306 = vld [vmem:[%s2 + $0x28] sm:$0xff]
      %v307 = vld [vmem:[%s2 + $0x30] sm:$0xff]
      %v308 = vld [vmem:[%s2 + $0x38] sm:$0xff]
      %v317 = vunpack.c.l.b16 %v301
      %v318 = vunpack.c.h.b16 %v301
      %v319 = vunpack.c.l.b16 %v302
      %v320 = vunpack.c.h.b16 %v302
      %v321 = vunpack.c.l.b16 %v303
      %v322 = vunpack.c.h.b16 %v303
      %v323 = vunpack.c.l.b16 %v304
      %v324 = vunpack.c.h.b16 %v304
      %v325 = vunpack.c.l.b16 %v305
      %v326 = vunpack.c.h.b16 %v305
      %v327 = vunpack.c.l.b16 %v306
      %v328 = vunpack.c.h.b16 %v306
      %v329 = vunpack.c.l.b16 %v307
      %v330 = vunpack.c.h.b16 %v307
      %v331 = vunpack.c.l.b16 %v308
      %v332 = vunpack.c.h.b16 %v308
      %v333 = vpack.c.b16 %v319, %v317
      %v334 = vpack.c.b16 %v320, %v318
      %v335 = vpack.c.b16 %v323, %v321
      %v336 = vpack.c.b16 %v324, %v322
      %v337 = vpack.c.b16 %v327, %v325
      %v338 = vpack.c.b16 %v328, %v326
      %v339 = vpack.c.b16 %v331, %v329
      %v340 = vpack.c.b16 %v332, %v330
      %vm349 = vcmask 523264
      %v351 = vsel %vm349, %v300, 0
      %353 = vmatprep.subr.bf16.mxu0 %v334
      %354 = vmatpush1.bf16.msra.mxu0 %v333
      %355 = vmatprep.subr.bf16.mxu0 %v336
      %356 = vmatpush1.bf16.msra.mxu0 %v335
      %357 = vmatprep.subr.bf16.mxu0 %v338
      %358 = vmatpush1.bf16.msra.mxu0 %v337
      %359 = vmatprep.subr.bf16.mxu0 %v340
      %360 = vmatpush1.bf16.msra.mxu0 %v339
      %361 = vmatprep.subr.bf16.mxu0 0
      %362 = vmatpush1.bf16.msra.mxu0 0
      %363 = vmatprep.subr.bf16.mxu0 0
      %364 = vmatpush1.bf16.msra.mxu0 0
      %365 = vmatprep.subr.bf16.mxu0 0
      %366 = vmatpush1.bf16.msra.mxu0 0
      %367 = vmatprep.subr.bf16.mxu0 0
      %368 = vmatpush1.bf16.msra.mxu0 0
      %369 = vmatprep.subr.bf16.mxu0 0
      %370 = vmatpush1.bf16.msra.mxu0 0
      %371 = vmatprep.subr.bf16.mxu0 0
      %372 = vmatpush1.bf16.msra.mxu0 0
      %373 = vmatprep.subr.bf16.mxu0 0
      %374 = vmatpush1.bf16.msra.mxu0 0
      %375 = vmatprep.subr.bf16.mxu0 0
      %376 = vmatpush1.bf16.msra.mxu0 0
      %377 = vmatprep.subr.bf16.mxu0 0
      %378 = vmatpush1.bf16.msra.mxu0 0
      %379 = vmatprep.subr.bf16.mxu0 0
      %380 = vmatpush1.bf16.msra.mxu0 0
      %381 = vmatprep.subr.bf16.mxu0 0
      %382 = vmatpush1.bf16.msra.mxu0 0
      %383 = vmatprep.subr.bf16.mxu0 0
      %384 = vmatpush1.bf16.msra.mxu0 0
      %385 = vmatprep.mubr.bf16.mxu0 0
      %386 = vmatmul.mubr.bf16.gmra.mrb[0].mxu0 %v351
      %v387 = vpop.f32.mrb[0].mxu0
      %v388 = vadd.f32 0.0, %v387
      %v389 = vpop.f32.mrb[0].mxu0
      %v390 = vadd.f32 0.0, %v389
      %v391 = vpop.f32.mrb[0].mxu0
      %v392 = vpop.f32.mrb[0].mxu0
      %393 = vdwg.mxu0
      %v394 = vld [vmem:[%s290] sm:$0xff]
      %v396 = vcombine.high %v394, %v394
      %v398 = vpack.c.bf16 %v394, %v394
      %v399 = vpack.c.bf16 %v396, %v396
      %v400 = vpack.c.bf16 %v388, %v388
      %v401 = vpack.c.bf16 %v390, %v390
      %v404 = vrot.slane %v400, 6
      %v405 = vrot.slane %v401, 6
      %vm406 = vcmask 1041408
      %v409 = vsel %vm406, %v398, %v404
      %v412 = vsel %vm406, %v399, %v405
      %v413 = vlaneseq
      %v414 = vand.u32 %v413, 127
      %v415 = vadd.s32 %v414, 128
      %vm416 = vcmp.lt.s32.totalorder %v414, 0
      %v417 = vsub.s32 0, %v414
      %v418 = vsel %vm416, %v417, %v414
      %v419 = vshrl.u32 %v418, 4
      %v420 = vand.u32 %v418, 15
      %v421 = vsub.s32 0, %v420
      %v422 = vsel %vm416, %v421, %v420
      %vm423 = vcmp.lt.s32.totalorder %v415, 0
      %v424 = vsub.s32 0, %v415
      %v425 = vsel %vm423, %v424, %v415
      %v426 = vshrl.u32 %v425, 4
      %v427 = vand.u32 %v425, 15
      %v428 = vsub.s32 0, %v427
      %v429 = vsel %vm423, %v428, %v427
      %vm430 = vcmp.ne.s32.totalorder %v422, 0
      %vm431 = vcmp.ne.s32.totalorder %v429, 0
      %vm432 = vcmp.lt.s32.totalorder %v422, 0
      %vm433 = vcmp.lt.s32.totalorder %v429, 0
      %vm434 = vmand %vm432, %vm430
      %vm435 = vmand %vm433, %vm431
      %v436 = vadd.s32 %v422, 16
      %v437 = vadd.s32 %v429, 16
      %v438 = vsel %vm434, %v436, %v422
      %v439 = vsel %vm435, %v437, %v429
      %vm440 = vcmp.gt.s32.totalorder %v438, 0
      %vm441 = vcmp.gt.s32.totalorder %v439, 0
      %vm442 = vcmp.lt.s32.totalorder %v438, 15
      %vm443 = vcmp.lt.s32.totalorder %v439, 15
      %446 = vrot.lane.b32.xlu0 %v409, 1
      %v447 = vpop.permute.xlu0 %446
      %448 = vrot.lane.b32.xlu0 %v412, 1
      %v449 = vpop.permute.xlu0 %448
      %vm450 = vcmask 7168
      %v451 = vsel %vm450, %v447, %v449
      %vm453 = vcmask 7168
      %v456 = vsel %vm453, 0, %v447
      %v458 = vsel %vm440, 1, 0
      %v459 = vsel %vm441, 1, 0
      %vm460 = vcmp.eq.s32.totalorder %v458, 1
      %vm461 = vcmp.eq.s32.totalorder %v459, 1
      %vm462 = vmpackc.low %vm461, %vm460
      %v463 = vsel %vm462, 65537, 0
      %v464 = vlaneseq
      %v465 = vshrl.u32 %v464, 7
      %v466 = vsub.s32 0, %v465
      %v467 = vrot.slane %v463, %v466
      %v468 = vlaneseq
      %v469 = vshrl.u32 %v468, 7
      %v470 = vsub.s32 4, %v469
      %v471 = vrot.slane %v463, %v470
      %vm472 = vcmp.ne.s16.totalorder %v467, 0
      %vm473 = vcmp.ne.s16.totalorder %v471, 0
      %v474 = vsel %vm472, %v456, 0
      %v475 = vsel %vm473, %v451, 0
      %476 = vrot.lane.b32.xlu0 %v409, 127
      %v477 = vpop.permute.xlu0 %476
      %478 = vrot.lane.b32.xlu0 %v412, 127
      %v479 = vpop.permute.xlu0 %478
      %vm480 = vcmask 1039360
      %v481 = vsel %vm480, %v477, %v479
      %vm483 = vcmask 1039360
      %v485 = vsel %vm483, %v479, 0
      %v487 = vsel %vm442, 1, 0
      %v488 = vsel %vm443, 1, 0
      %vm489 = vcmp.eq.s32.totalorder %v487, 1
      %vm490 = vcmp.eq.s32.totalorder %v488, 1
      %vm491 = vmpackc.low %vm490, %vm489
      %v492 = vsel %vm491, 65537, 0
      %v493 = vlaneseq
      %v494 = vshrl.u32 %v493, 7
      %v495 = vsub.s32 0, %v494
      %v496 = vrot.slane %v492, %v495
      %v497 = vlaneseq
      %v498 = vshrl.u32 %v497, 7
      %v499 = vsub.s32 4, %v498
      %v500 = vrot.slane %v492, %v499
      %vm501 = vcmp.ne.s16.totalorder %v496, 0
      %vm502 = vcmp.ne.s16.totalorder %v500, 0
      %v503 = vsel %vm501, %v481, 0
      %v504 = vsel %vm502, %v485, 0
      %v505 = vrot.slane %v409, 4
      %v506 = vrot.slane %v412, 4
      %vm507 = vcmask 1043456
      %v510 = vsel %vm507, %v474, %v505
      %v514 = vsel %vm507, %v475, %v506
      %520 = vrot.lane.b32.xlu0 %v510, 16
      %v521 = vpop.permute.xlu0 %520
      %522 = vrot.lane.b32.xlu0 %v514, 16
      %v523 = vpop.permute.xlu0 %522
      %524 = vrot.lane.b32.xlu0 %v503, 16
      %v525 = vpop.permute.xlu0 %524
      %526 = vrot.lane.b32.xlu0 %v504, 16
      %v527 = vpop.permute.xlu0 %526
      %vm528 = vcmask 130048
      %v529 = vsel %vm528, %v521, %v523
      %v530 = vsel %vm528, %v525, %v527
      %vm532 = vcmask 130048
      %v534 = vsel %vm532, 0, %v521
      %v537 = vsel %vm532, 0, %v525
      %v538 = vld [vmem:[%s3] sm:$0x3]
      %s539 = scalar_lea.vmem %s3, 2
      %v540 = vld [vmem:[%s539] sm:$0x3]
      %vm541 = vcmask 195584
      %v543 = vsel %vm541, %v540, 0
      %v546 = vsel %vm507, %v503, 0
      %v549 = vsel %vm507, %v504, 0
      %551 = vmatprep.subr.bf16.mxu0 %v514
      %552 = vmatpush1.bf16.msra.mxu0 %v510
      %553 = vmatprep.subr.bf16.mxu0 %v549
      %554 = vmatpush1.bf16.msra.mxu0 %v546
      %555 = vmatprep.subr.bf16.mxu0 0
      %556 = vmatpush1.bf16.msra.mxu0 0
      %557 = vmatprep.subr.bf16.mxu0 0
      %558 = vmatpush1.bf16.msra.mxu0 0
      %559 = vmatprep.subr.bf16.mxu0 0
      %560 = vmatpush1.bf16.msra.mxu0 0
      %561 = vmatprep.subr.bf16.mxu0 0
      %562 = vmatpush1.bf16.msra.mxu0 0
      %563 = vmatprep.subr.bf16.mxu0 0
      %564 = vmatpush1.bf16.msra.mxu0 0
      %565 = vmatprep.subr.bf16.mxu0 0
      %566 = vmatpush1.bf16.msra.mxu0 0
      %567 = vmatprep.subr.bf16.mxu0 0
      %568 = vmatpush1.bf16.msra.mxu0 0
      %569 = vmatprep.subr.bf16.mxu0 0
      %570 = vmatpush1.bf16.msra.mxu0 0
      %571 = vmatprep.subr.bf16.mxu0 0
      %572 = vmatpush1.bf16.msra.mxu0 0
      %573 = vmatprep.subr.bf16.mxu0 0
      %574 = vmatpush1.bf16.msra.mxu0 0
      %575 = vmatprep.subr.bf16.mxu0 0
      %576 = vmatpush1.bf16.msra.mxu0 0
      %577 = vmatprep.subr.bf16.mxu0 0
      %578 = vmatpush1.bf16.msra.mxu0 0
      %579 = vmatprep.subr.bf16.mxu0 0
      %580 = vmatpush1.bf16.msra.mxu0 0
      %581 = vmatprep.subr.bf16.mxu0 0
      %582 = vmatpush1.bf16.msra.mxu0 0
      %583 = vmatprep.mubr.bf16.mxu0 0
      %584 = vmatmul.mubr.bf16.gmra.mrb[0].mxu0 %v543
      %v585 = vpop.f32.mrb[0].mxu0
      %v586 = vadd.f32 0.0, %v585
      %v587 = vpop.f32.mrb[0].mxu0
      %v588 = vadd.f32 0.0, %v587
      %v589 = vpop.f32.mrb[0].mxu0
      %v590 = vpop.f32.mrb[0].mxu0
      %591 = vdwg.mxu0
      %v593 = vsel %vm541, %v538, 0
      %v595 = vsel %vm507, %v537, 0
      %v598 = vsel %vm507, %v530, 0
      %600 = vmatprep.subr.bf16.mxu0 %v529
      %601 = vmatpush1.bf16.msra.mxu0 %v534
      %602 = vmatprep.subr.bf16.mxu0 %v598
      %603 = vmatpush1.bf16.msra.mxu0 %v595
      %604 = vmatprep.subr.bf16.mxu0 0
      %605 = vmatpush1.bf16.msra.mxu0 0
      %606 = vmatprep.subr.bf16.mxu0 0
      %607 = vmatpush1.bf16.msra.mxu0 0
      %608 = vmatprep.subr.bf16.mxu0 0
      %609 = vmatpush1.bf16.msra.mxu0 0
      %610 = vmatprep.subr.bf16.mxu0 0
      %611 = vmatpush1.bf16.msra.mxu0 0
      %612 = vmatprep.subr.bf16.mxu0 0
      %613 = vmatpush1.bf16.msra.mxu0 0
      %614 = vmatprep.subr.bf16.mxu0 0
      %615 = vmatpush1.bf16.msra.mxu0 0
      %616 = vmatprep.subr.bf16.mxu0 0
      %617 = vmatpush1.bf16.msra.mxu0 0
      %618 = vmatprep.subr.bf16.mxu0 0
      %619 = vmatpush1.bf16.msra.mxu0 0
      %620 = vmatprep.subr.bf16.mxu0 0
      %621 = vmatpush1.bf16.msra.mxu0 0
      %622 = vmatprep.subr.bf16.mxu0 0
      %623 = vmatpush1.bf16.msra.mxu0 0
      %624 = vmatprep.subr.bf16.mxu0 0
      %625 = vmatpush1.bf16.msra.mxu0 0
      %626 = vmatprep.subr.bf16.mxu0 0
      %627 = vmatpush1.bf16.msra.mxu0 0
      %628 = vmatprep.subr.bf16.mxu0 0
      %629 = vmatpush1.bf16.msra.mxu0 0
      %630 = vmatprep.subr.bf16.mxu0 0
      %631 = vmatpush1.bf16.msra.mxu0 0
      %632 = vmatprep.mubr.bf16.mxu0 0
      %633 = vmatmul.mubr.bf16.gmra.mrb[0].mxu0 %v593
      %v634 = vpop.f32.mrb[0].mxu0
      %v635 = vadd.f32 %v586, %v634
      %v636 = vpop.f32.mrb[0].mxu0
      %v637 = vadd.f32 %v588, %v636
      %v638 = vpop.f32.mrb[0].mxu0
      %v639 = vpop.f32.mrb[0].mxu0
      %640 = vdwg.mxu0
      %641 = vrot.lane.b32.xlu0 %v510, 112
      %v642 = vpop.permute.xlu0 %641
      %643 = vrot.lane.b32.xlu0 %v514, 112
      %v644 = vpop.permute.xlu0 %643
      %645 = vrot.lane.b32.xlu0 %v503, 112
      %v646 = vpop.permute.xlu0 %645
      %647 = vrot.lane.b32.xlu0 %v504, 112
      %v648 = vpop.permute.xlu0 %647
      %vm649 = vcmask 916480
      %v650 = vsel %vm649, %v642, %v644
      %v651 = vsel %vm649, %v646, %v648
      %vm653 = vcmask 916480
      %v655 = vsel %vm653, %v644, 0
      %v658 = vsel %vm653, %v648, 0
      %s659 = scalar_lea.vmem %s3, 4
      %v660 = vld [vmem:[%s659] sm:$0x3]
      %v662 = vsel %vm541, %v660, 0
      %v665 = vsel %vm507, %v651, 0
      %v667 = vsel %vm507, %v658, 0
      %669 = vmatprep.subr.bf16.mxu0 %v655
      %670 = vmatpush1.bf16.msra.mxu0 %v650
      %671 = vmatprep.subr.bf16.mxu0 %v667
      %672 = vmatpush1.bf16.msra.mxu0 %v665
      %673 = vmatprep.subr.bf16.mxu0 0
      %674 = vmatpush1.bf16.msra.mxu0 0
      %675 = vmatprep.subr.bf16.mxu0 0
      %676 = vmatpush1.bf16.msra.mxu0 0
      %677 = vmatprep.subr.bf16.mxu0 0
      %678 = vmatpush1.bf16.msra.mxu0 0
      %679 = vmatprep.subr.bf16.mxu0 0
      %680 = vmatpush1.bf16.msra.mxu0 0
      %681 = vmatprep.subr.bf16.mxu0 0
      %682 = vmatpush1.bf16.msra.mxu0 0
      %683 = vmatprep.subr.bf16.mxu0 0
      %684 = vmatpush1.bf16.msra.mxu0 0
      %685 = vmatprep.subr.bf16.mxu0 0
      %686 = vmatpush1.bf16.msra.mxu0 0
      %687 = vmatprep.subr.bf16.mxu0 0
      %688 = vmatpush1.bf16.msra.mxu0 0
      %689 = vmatprep.subr.bf16.mxu0 0
      %690 = vmatpush1.bf16.msra.mxu0 0
      %691 = vmatprep.subr.bf16.mxu0 0
      %692 = vmatpush1.bf16.msra.mxu0 0
      %693 = vmatprep.subr.bf16.mxu0 0
      %694 = vmatpush1.bf16.msra.mxu0 0
      %695 = vmatprep.subr.bf16.mxu0 0
      %696 = vmatpush1.bf16.msra.mxu0 0
      %697 = vmatprep.subr.bf16.mxu0 0
      %698 = vmatpush1.bf16.msra.mxu0 0
      %699 = vmatprep.subr.bf16.mxu0 0
      %700 = vmatpush1.bf16.msra.mxu0 0
      %701 = vmatprep.mubr.bf16.mxu0 0
      %702 = vmatmul.mubr.bf16.gmra.mrb[0].mxu0 %v662
      %v703 = vpop.f32.mrb[0].mxu0
      %v704 = vadd.f32 0.0, %v703
      %v705 = vpop.f32.mrb[0].mxu0
      %v706 = vadd.f32 0.0, %v705
      %v707 = vpop.f32.mrb[0].mxu0
      %v708 = vpop.f32.mrb[0].mxu0
      %709 = vdwg.mxu0
      %v710 = vadd.f32 %v635, %v704
      %v711 = vadd.f32 %v637, %v706
      %v712 = vld [vmem:[%s4] sm:$0xf]
      %714 = vset.pattern.permute.xlu0 0
      %715 = vperm.xlu0 %714, %v712
      %v716 = vpop.permute.xlu0 %715
      %v718 = vadd.f32 %v710, %v716
      %v719 = vadd.f32 %v711, %v716
      %v720 = vmax.f32 %v718, 0.0
      %v721 = vmax.f32 %v719, 0.0
      %v722 = vpack.c.bf16 %v720, %v720
      %v723 = vpack.c.bf16 %v721, %v721
      %726 = vrot.lane.b32.xlu0 %v722, 1
      %v727 = vpop.permute.xlu0 %726
      %728 = vrot.lane.b32.xlu0 %v723, 1
      %v729 = vpop.permute.xlu0 %728
      %v730 = vsel %vm450, %v727, %v729
      %v733 = vsel %vm453, 0, %v727
      %v735 = vsel %vm472, %v733, 0
      %v736 = vsel %vm473, %v730, 0
      %737 = vrot.lane.b32.xlu0 %v722, 127
      %v738 = vpop.permute.xlu0 %737
      %739 = vrot.lane.b32.xlu0 %v723, 127
      %v740 = vpop.permute.xlu0 %739
      %v741 = vsel %vm480, %v738, %v740
      %v744 = vsel %vm483, %v740, 0
      %v746 = vsel %vm501, %v741, 0
      %v747 = vsel %vm502, %v744, 0
      %v748 = vrot.slane %v722, 6
      %v749 = vrot.slane %v723, 6
      %v752 = vrot.slane %v746, 4
      %v753 = vrot.slane %v747, 4
      %v756 = vsel %vm406, %v735, %v748
      %v759 = vsel %vm406, %v736, %v749
      %v761 = vsel %vm507, %v756, %v752
      %v763 = vsel %vm507, %v759, %v753
      %766 = vrot.lane.b32.xlu0 %v761, 16
      %v767 = vpop.permute.xlu0 %766
      %768 = vrot.lane.b32.xlu0 %v763, 16
      %v769 = vpop.permute.xlu0 %768
      %v770 = vsel %vm528, %v767, %v769
      %v772 = vsel %vm532, 0, %v767
      %v773 = vld [vmem:[%s5] sm:$0x3]
      %s774 = scalar_lea.vmem %s5, 2
      %v775 = vld [vmem:[%s774] sm:$0x3]
      %vm776 = vcmask 97280
      %v778 = vsel %vm776, %v775, 0
      %vm780 = vcmask 1045504
      %v781 = vsel %vm780, %v761, 0
      %v783 = vsel %vm780, %v763, 0
      %785 = vmatprep.subr.bf16.mxu0 %v783
      %786 = vmatpush1.bf16.msra.mxu0 %v781
      %787 = vmatprep.subr.bf16.mxu0 0
      %788 = vmatpush1.bf16.msra.mxu0 0
      %789 = vmatprep.subr.bf16.mxu0 0
      %790 = vmatpush1.bf16.msra.mxu0 0
      %791 = vmatprep.subr.bf16.mxu0 0
      %792 = vmatpush1.bf16.msra.mxu0 0
      %793 = vmatprep.subr.bf16.mxu0 0
      %794 = vmatpush1.bf16.msra.mxu0 0
      %795 = vmatprep.subr.bf16.mxu0 0
      %796 = vmatpush1.bf16.msra.mxu0 0
      %797 = vmatprep.subr.bf16.mxu0 0
      %798 = vmatpush1.bf16.msra.mxu0 0
      %799 = vmatprep.subr.bf16.mxu0 0
      %800 = vmatpush1.bf16.msra.mxu0 0
      %801 = vmatprep.subr.bf16.mxu0 0
      %802 = vmatpush1.bf16.msra.mxu0 0
      %803 = vmatprep.subr.bf16.mxu0 0
      %804 = vmatpush1.bf16.msra.mxu0 0
      %805 = vmatprep.subr.bf16.mxu0 0
      %806 = vmatpush1.bf16.msra.mxu0 0
      %807 = vmatprep.subr.bf16.mxu0 0
      %808 = vmatpush1.bf16.msra.mxu0 0
      %809 = vmatprep.subr.bf16.mxu0 0
      %810 = vmatpush1.bf16.msra.mxu0 0
      %811 = vmatprep.subr.bf16.mxu0 0
      %812 = vmatpush1.bf16.msra.mxu0 0
      %813 = vmatprep.subr.bf16.mxu0 0
      %814 = vmatpush1.bf16.msra.mxu0 0
      %815 = vmatprep.subr.bf16.mxu0 0
      %816 = vmatpush1.bf16.msra.mxu0 0
      %817 = vmatprep.mubr.bf16.mxu0 0
      %818 = vmatmul.mubr.bf16.gmra.mrb[0].mxu0 %v778
      %v819 = vpop.f32.mrb[0].mxu0
      %v820 = vadd.f32 0.0, %v819
      %v821 = vpop.f32.mrb[0].mxu0
      %v822 = vadd.f32 0.0, %v821
      %v823 = vpop.f32.mrb[0].mxu0
      %v824 = vpop.f32.mrb[0].mxu0
      %825 = vdwg.mxu0
      %v827 = vsel %vm776, %v773, 0
      %v829 = vsel %vm780, %v772, 0
      %v832 = vsel %vm780, %v770, 0
      %834 = vmatprep.subr.bf16.mxu0 %v832
      %835 = vmatpush1.bf16.msra.mxu0 %v829
      %836 = vmatprep.subr.bf16.mxu0 0
      %837 = vmatpush1.bf16.msra.mxu0 0
      %838 = vmatprep.subr.bf16.mxu0 0
      %839 = vmatpush1.bf16.msra.mxu0 0
      %840 = vmatprep.subr.bf16.mxu0 0
      %841 = vmatpush1.bf16.msra.mxu0 0
      %842 = vmatprep.subr.bf16.mxu0 0
      %843 = vmatpush1.bf16.msra.mxu0 0
      %844 = vmatprep.subr.bf16.mxu0 0
      %845 = vmatpush1.bf16.msra.mxu0 0
      %846 = vmatprep.subr.bf16.mxu0 0
      %847 = vmatpush1.bf16.msra.mxu0 0
      %848 = vmatprep.subr.bf16.mxu0 0
      %849 = vmatpush1.bf16.msra.mxu0 0
      %850 = vmatprep.subr.bf16.mxu0 0
      %851 = vmatpush1.bf16.msra.mxu0 0
      %852 = vmatprep.subr.bf16.mxu0 0
      %853 = vmatpush1.bf16.msra.mxu0 0
      %854 = vmatprep.subr.bf16.mxu0 0
      %855 = vmatpush1.bf16.msra.mxu0 0
      %856 = vmatprep.subr.bf16.mxu0 0
      %857 = vmatpush1.bf16.msra.mxu0 0
      %858 = vmatprep.subr.bf16.mxu0 0
      %859 = vmatpush1.bf16.msra.mxu0 0
      %860 = vmatprep.subr.bf16.mxu0 0
      %861 = vmatpush1.bf16.msra.mxu0 0
      %862 = vmatprep.subr.bf16.mxu0 0
      %863 = vmatpush1.bf16.msra.mxu0 0
      %864 = vmatprep.subr.bf16.mxu0 0
      %865 = vmatpush1.bf16.msra.mxu0 0
      %866 = vmatprep.mubr.bf16.mxu0 0
      %867 = vmatmul.mubr.bf16.gmra.mrb[0].mxu0 %v827
      %v868 = vpop.f32.mrb[0].mxu0
      %v869 = vadd.f32 %v820, %v868
      %v870 = vpop.f32.mrb[0].mxu0
      %v871 = vadd.f32 %v822, %v870
      %v872 = vpop.f32.mrb[0].mxu0
      %v873 = vpop.f32.mrb[0].mxu0
      %874 = vdwg.mxu0
      %875 = vrot.lane.b32.xlu0 %v761, 112
      %v876 = vpop.permute.xlu0 %875
      %877 = vrot.lane.b32.xlu0 %v763, 112
      %v878 = vpop.permute.xlu0 %877
      %v879 = vsel %vm649, %v876, %v878
      %v881 = vsel %vm653, %v878, 0
      %s882 = scalar_lea.vmem %s5, 4
      %v883 = vld [vmem:[%s882] sm:$0x3]
      %v885 = vsel %vm776, %v883, 0
      %v888 = vsel %vm780, %v879, 0
      %v890 = vsel %vm780, %v881, 0
      %892 = vmatprep.subr.bf16.mxu0 %v890
      %893 = vmatpush1.bf16.msra.mxu0 %v888
      %894 = vmatprep.subr.bf16.mxu0 0
      %895 = vmatpush1.bf16.msra.mxu0 0
      %896 = vmatprep.subr.bf16.mxu0 0
      %897 = vmatpush1.bf16.msra.mxu0 0
      %898 = vmatprep.subr.bf16.mxu0 0
      %899 = vmatpush1.bf16.msra.mxu0 0
      %900 = vmatprep.subr.bf16.mxu0 0
      %901 = vmatpush1.bf16.msra.mxu0 0
      %902 = vmatprep.subr.bf16.mxu0 0
      %903 = vmatpush1.bf16.msra.mxu0 0
      %904 = vmatprep.subr.bf16.mxu0 0
      %905 = vmatpush1.bf16.msra.mxu0 0
      %906 = vmatprep.subr.bf16.mxu0 0
      %907 = vmatpush1.bf16.msra.mxu0 0
      %908 = vmatprep.subr.bf16.mxu0 0
      %909 = vmatpush1.bf16.msra.mxu0 0
      %910 = vmatprep.subr.bf16.mxu0 0
      %911 = vmatpush1.bf16.msra.mxu0 0
      %912 = vmatprep.subr.bf16.mxu0 0
      %913 = vmatpush1.bf16.msra.mxu0 0
      %914 = vmatprep.subr.bf16.mxu0 0
      %915 = vmatpush1.bf16.msra.mxu0 0
      %916 = vmatprep.subr.bf16.mxu0 0
      %917 = vmatpush1.bf16.msra.mxu0 0
      %918 = vmatprep.subr.bf16.mxu0 0
      %919 = vmatpush1.bf16.msra.mxu0 0
      %920 = vmatprep.subr.bf16.mxu0 0
      %921 = vmatpush1.bf16.msra.mxu0 0
      %922 = vmatprep.subr.bf16.mxu0 0
      %923 = vmatpush1.bf16.msra.mxu0 0
      %924 = vmatprep.mubr.bf16.mxu0 0
      %925 = vmatmul.mubr.bf16.gmra.mrb[0].mxu0 %v885
      %v926 = vpop.f32.mrb[0].mxu0
      %v927 = vadd.f32 0.0, %v926
      %v928 = vpop.f32.mrb[0].mxu0
      %v929 = vadd.f32 0.0, %v928
      %v930 = vpop.f32.mrb[0].mxu0
      %v931 = vpop.f32.mrb[0].mxu0
      %932 = vdwg.mxu0
      %v933 = vadd.f32 %v869, %v927
      %v934 = vadd.f32 %v871, %v929
      %v935 = vld [vmem:[%s6] sm:$0xf]
      %937 = vset.pattern.permute.xlu0 0
      %938 = vperm.xlu0 %937, %v935
      %v939 = vpop.permute.xlu0 %938
      %v941 = vadd.f32 %v933, %v939
      %v942 = vadd.f32 %v934, %v939
      %v943 = vmax.f32 %v941, 0.0
      %v944 = vmax.f32 %v942, 0.0
      %v947 = vcombine.low %v943, %v944
      %949 = vst [vmem:[%s295] sm:$0xff] %v947
      %p950 = scmp.lt.s32.totalorder %s18, 1
      %s951 = scalar_select %p950, %s18, 1
      %s952 = smul.addr %s951, 2
      %s953 = smul.addr %s952, 4
      %s954 = scalar_lea.vmem %s7, %s953
      // Predicated region
      $region49: #{high_res_up_forward.1} parent=47 // pred_check
        %p955 = pneg %p193
      $region50: #{high_res_up_forward.1} parent=47 // pred_check_branch
        %957 = sbr.rel (%p955) target = $region52
      $region51: #{high_res_up_forward.1} parent=47 // pred_region
        _
      $region52: #{high_res_up_forward.1} parent=47 // pred_fallthru
        _
    $region48: #{high_res_up_forward.1} parent=5 // pred_fallthru
      _
    %p958 = scmp.le.s32.totalorder 2, %s13
    // Predicated region
    $region53: #{high_res_up_forward.1} parent=5 // pred_check
      %p959 = pneg %p958
    $region54: #{high_res_up_forward.1} parent=5 // pred_check_branch
      %961 = sbr.rel (%p959) target = $region56
    $region55: #{high_res_up_forward.1} parent=5 // pred_region
      %s962 = ssub.s32 %s13, 2
      // Predicated region
      $region57: #{high_res_up_forward.1} parent=55 // pred_check
        %p963 = pneg %p199
      $region58: #{high_res_up_forward.1} parent=55 // pred_check_branch
        %965 = sbr.rel (%p963) target = $region60
      $region59: #{high_res_up_forward.1} parent=55 // pred_region
        %p966 = scmp.lt.s32.totalorder %s19, 1
        %s967 = scalar_select %p966, %s19, 1
        %s968 = smul.addr %s967, 2
        %s969 = smul.addr %s968, 4
        %s970 = scalar_lea.vmem %s7, %s969
      $region60: #{high_res_up_forward.1} parent=55 // pred_fallthru
        _
    $region56: #{high_res_up_forward.1} parent=5 // pred_fallthru
      _
  $region6: #{high_res_up_forward.1} parent=0 // loop_footer
    %s17 = sadd.s32 1, %s13
  $region7: #{high_res_up_forward.1} parent=0 // loop_footer_branch
    %12 = sbr.rel target = $region3
  $region8: #{high_res_up_forward.1} parent=0 // loop_exit
    _

</llo_original>
